<compile_context>
chip_gen: v7x
topology: tpu7x:2x2x1
jax: 0.10.0
libtpu: 0.0.40
codegen_flags: <defaults>
</compile_context>

<pallas_src>
import functools

import jax
import jax.numpy as jnp
from jax import lax
from jax.experimental import pallas as pl
from jax.experimental.pallas import tpu as pltpu

LN_EPS = 1e-5


def _duration_predictor_kernel(lengths_ref, x_ref, w1_ref, w2_ref, vec_ref,
                               out_ref, *, seq_len, n_batch):
    # lengths_ref : (B,)      int32, SMEM (scalar-prefetched valid lengths)
    # x_ref       : (M, Cin)  fused batch*time rows, channels on lanes
    # w1_ref      : (3*Cin,F) conv1 weight, taps [t-1, t, t+1] stacked along K
    # w2_ref      : (3*F, F)  conv2 weight, same layout
    # vec_ref     : (8, F)    rows: b1, g1, be1, b2, g2, be2, w_linear, b_linear
    # out_ref     : (M, 1)
    m_rows = x_ref.shape[0]
    vec = vec_ref[...]

    # Position of each fused row inside its own sequence -> boundary masks
    # that stop the time shifts from bleeding across batch elements.
    row = lax.broadcasted_iota(jnp.int32, (m_rows, 1), 0)
    t_in_seq = row % seq_len
    not_first = t_in_seq != 0                    # row has a valid t-1 neighbour
    not_last = t_in_seq != (seq_len - 1)         # row has a valid t+1 neighbour

    # Build the valid-position mask in-kernel from the scalar-prefetched
    # lengths instead of DMA'ing a (M, 1) mask column from HBM.  Rows are
    # batch-major, so a short static select chain over B suffices.
    len_col = jnp.full((m_rows, 1), lengths_ref[0], dtype=jnp.int32)
    for b in range(1, n_batch):                  # static, tiny (B elements)
        len_col = jnp.where(row >= b * seq_len, lengths_ref[b], len_col)
    mask = (t_in_seq < len_col).astype(x_ref.dtype)        # (M, 1)

    x = x_ref[...] * mask                        # masked input (matches PyTorch)

    def conv_ln_relu(h, w, b, g, be):
        # kernel=3 / padding=1 conv over time as ONE K=3*C MXU matmul.
        # pltpu.roll issues on the XLU slot (no slice+concat VMEM copies); the
        # wrapped boundary rows are explicitly zeroed, so per-sequence conv
        # windows never mix adjacent batch elements.
        h_prev = jnp.where(not_first, pltpu.roll(h, shift=1, axis=0), 0.0)            # x[t-1]
        h_next = jnp.where(not_last, pltpu.roll(h, shift=m_rows - 1, axis=0), 0.0)    # x[t+1]
        hx = jnp.concatenate([h_prev, h, h_next], axis=1)             # (M, 3C)
        y = jnp.dot(hx, w, preferred_element_type=jnp.float32) + b
        # LayerNorm over channels with single-pass moments: both cross-lane
        # reductions depend only on y (they can overlap on the XLU) and the
        # extra (y - mu)^2 VPU pass is eliminated.
        inv_f = 1.0 / y.shape[-1]
        s1 = jnp.sum(y, axis=-1, keepdims=True)
        s2 = jnp.sum(y * y, axis=-1, keepdims=True)
        mu = s1 * inv_f
        var = s2 * inv_f - mu * mu
        y = (y - mu) * lax.rsqrt(var + LN_EPS) * g + be
        return jnp.maximum(y, 0.0)               # ReLU; dropout = identity (eval)

    h1 = conv_ln_relu(x,  w1_ref[...], vec[0:1], vec[1:2], vec[2:3])
    h2 = conv_ln_relu(h1, w2_ref[...], vec[3:4], vec[4:5], vec[5:6])

    # Final Linear (F -> 1) on the VPU (multiply + cross-lane sum) instead of a
    # 1-wide MXU matmul, then mask and ReLU.
    wl = vec[6:7]                                # (1, F)
    bl = vec[7:8, 0:1]                           # (1, 1)
    proj = jnp.sum(h2 * wl, axis=-1, keepdims=True)          # (M, 1)
    out_ref[...] = jnp.maximum((proj + bl) * mask, 0.0)


def duration_predictor_forward(encoder_output, lengths, params):
    """encoder_output: (B, T, Cin) f32; lengths: (B,) int — number of valid
    (prefix) positions per sequence, i.e. the PyTorch module's channel-broadcast
    binary mask in compact form.  Returns (1, B, T) like the PyTorch module in
    eval mode (out.squeeze().unsqueeze(0))."""
    B, T, Cin = encoder_output.shape
    Fc = params["vec"].shape[1]
    M = B * T

    x2d = encoder_output.reshape(M, Cin)
    lengths_i32 = lengths.astype(jnp.int32)

    kernel = functools.partial(_duration_predictor_kernel, seq_len=T, n_batch=B)
    out_col = pl.pallas_call(
        kernel,
        out_shape=jax.ShapeDtypeStruct((M, 1), jnp.float32),
        grid_spec=pltpu.PrefetchScalarGridSpec(
            num_scalar_prefetch=1,               # lengths -> SMEM
            grid=(1,),
            in_specs=[
                pl.BlockSpec((M, Cin), lambda i, lens: (0, 0)),       # fused (B*T, Cin)
                pl.BlockSpec((3 * Cin, Fc), lambda i, lens: (0, 0)),  # conv1 fused weight
                pl.BlockSpec((3 * Fc, Fc), lambda i, lens: (0, 0)),   # conv2 fused weight
                pl.BlockSpec((8, Fc), lambda i, lens: (0, 0)),        # packed small vectors
            ],
            out_specs=pl.BlockSpec((M, 1), lambda i, lens: (0, 0)),
        ),
        compiler_params=pltpu.CompilerParams(
            dimension_semantics=("arbitrary",)),
    )(lengths_i32, x2d, params["w1"], params["w2"], params["vec"])

    # PyTorch: out.squeeze() then (eval mode) out.unsqueeze(0) -> (1, B, T)
    return out_col.reshape(1, B, T)


def mask_to_lengths(encoder_output_mask):
    """PyTorch-interface shim: (B, T) or channel-broadcast (B, T, C) binary
    prefix mask -> (B,) int32 valid lengths consumed by the kernel."""
    if encoder_output_mask.ndim == 3:
        encoder_output_mask = encoder_output_mask[:, :, 0]
    return jnp.sum(encoder_output_mask, axis=1).astype(jnp.int32)


# ----------------------------- parameters ----------------------------------
def xavier_uniform(key, shape, fan_in, fan_out, gain):
    limit = gain * jnp.sqrt(6.0 / (fan_in + fan_out))
    return jax.random.uniform(key, shape, jnp.float32, -limit, limit)


def init_params(key, c_in, c_filter, ksize=3):
    """Parameters in the fused layout consumed by the kernel.

    PyTorch layouts: Conv1d weight (out, in, k); Linear weight (out, in).
    Fused conv weight: (k*in, out); tap k=0 multiplies x[t-1] (padding=1
    cross-correlation), k=1 multiplies x[t], k=2 multiplies x[t+1].
    """
    assert ksize == 3, "kernel is specialized for kernel_size=3, padding=1"
    gain = jnp.sqrt(2.0)                       # nn.init.calculate_gain('relu')
    keys = jax.random.split(key, 6)

    w1_pt = xavier_uniform(keys[0], (c_filter, c_in, ksize),
                           fan_in=c_in * ksize, fan_out=c_filter * ksize, gain=gain)
    w2_pt = xavier_uniform(keys[1], (c_filter, c_filter, ksize),
                           fan_in=c_filter * ksize, fan_out=c_filter * ksize, gain=gain)
    wl_pt = xavier_uniform(keys[2], (1, c_filter),
                           fan_in=c_filter, fan_out=1, gain=gain)

    b1 = jax.random.uniform(keys[3], (c_filter,), jnp.float32, -0.05, 0.05)
    b2 = jax.random.uniform(keys[4], (c_filter,), jnp.float32, -0.05, 0.05)
    bl = jax.random.uniform(keys[5], (), jnp.float32, -0.05, 0.05)

    def fuse_conv(w_pt):                       # (out, in, k) -> (k*in, out)
        k_in_out = jnp.transpose(w_pt, (2, 1, 0))
        return k_in_out.reshape(-1, w_pt.shape[0])

    vec = jnp.stack([
        b1,                                    # conv1 bias
        jnp.ones((c_filter,), jnp.float32),    # ln1 gamma
        jnp.zeros((c_filter,), jnp.float32),   # ln1 beta
        b2,                                    # conv2 bias
        jnp.ones((c_filter,), jnp.float32),    # ln2 gamma
        jnp.zeros((c_filter,), jnp.float32),   # ln2 beta
        wl_pt[0],                              # final linear weight row
        jnp.full((c_filter,), bl),             # final linear bias (broadcast row)
    ], axis=0)                                 # (8, F)

    # TODO(synk): for production-T tiling, store w1/w2 as bf16 (MXU-native on
    # v5e/v6e/v7x) and cast hx to bf16 before the matmuls; f32 is kept here so
    # the tiny-shape kernel matches the f32 reference bit-tightly.
    return {"w1": fuse_conv(w1_pt), "w2": fuse_conv(w2_pt), "vec": vec}


# ------------------------- plain-JAX reference ------------------------------
def reference_forward(encoder_output, encoder_output_mask, params):
    if encoder_output_mask.ndim == 3:
        mask_bt = encoder_output_mask[:, :, 0]
    else:
        mask_bt = encoder_output_mask
    x = encoder_output * mask_bt[:, :, None]
    vec = params["vec"]

    def conv_ln_relu(h, w_fused, b, g, be):
        c = h.shape[-1]
        w = w_fused.reshape(3, c, -1)
        zero = jnp.zeros_like(h[:, :1, :])
        h_prev = jnp.concatenate([zero, h[:, :-1, :]], axis=1)
        h_next = jnp.concatenate([h[:, 1:, :], zero], axis=1)
        y = (jnp.einsum("btc,cf->btf", h_prev, w[0])
             + jnp.einsum("btc,cf->btf", h, w[1])
             + jnp.einsum("btc,cf->btf", h_next, w[2]) + b)
        mu = jnp.mean(y, axis=-1, keepdims=True)
        var = jnp.mean((y - mu) ** 2, axis=-1, keepdims=True)
        y = (y - mu) / jnp.sqrt(var + LN_EPS) * g + be
        return jnp.maximum(y, 0.0)

    h1 = conv_ln_relu(x, params["w1"], vec[0], vec[1], vec[2])
    h2 = conv_ln_relu(h1, params["w2"], vec[3], vec[4], vec[5])
    o = jnp.einsum("btf,f->bt", h2, vec[6]) + vec[7, 0]
    o = jnp.maximum(o * mask_bt, 0.0)
    return o[None]


if __name__ == "__main__":
    B, T = 2, 16
    ENC_SIZE, FILTER_SIZE, KERNEL = 32, 32, 3

    key = jax.random.PRNGKey(0)
    k_x, k_p = jax.random.split(key)
    encoder_output = jax.random.normal(k_x, (B, T, ENC_SIZE), jnp.float32)

    # Valid-prefix lengths; the kernel rebuilds the binary mask in-SMEM from
    # these (no mask DMA).  The PyTorch-style broadcast mask is only built for
    # the plain-JAX reference.
    lengths = jnp.array([T, T - 4], dtype=jnp.int32)
    encoder_output_mask = (jnp.arange(T)[None, :] < lengths[:, None]).astype(jnp.float32)

    params = init_params(k_p, ENC_SIZE, FILTER_SIZE, KERNEL)

    out = duration_predictor_forward(encoder_output, lengths, params)
    out = jax.block_until_ready(out)

    ref = reference_forward(encoder_output, encoder_output_mask, params)
    assert out.shape == (1, B, T), out.shape
    assert jnp.allclose(out, ref, atol=2e-4, rtol=2e-4), "mismatch vs JAX reference"
    # The mask->lengths interface shim agrees with the direct lengths path.
    assert jnp.array_equal(mask_to_lengths(encoder_output_mask), lengths)

    print("KERNEL_OK")
</pallas_src>

<mosaic_0001>
module attributes {stable_mosaic.version = 11 : i64} {
  func.func @_duration_predictor_kernel(%arg0: i32, %arg1: memref<2xi32, #tpu.memory_space<smem>>, %arg2: memref<32x32xf32, #tpu.memory_space<vmem>>, %arg3: memref<96x32xf32, #tpu.memory_space<vmem>>, %arg4: memref<96x32xf32, #tpu.memory_space<vmem>>, %arg5: memref<8x32xf32, #tpu.memory_space<vmem>>, %arg6: memref<32x1xf32, #tpu.memory_space<vmem>>) attributes {dimension_semantics = [#tpu.dimension_semantics<arbitrary>], iteration_bounds = array<i64: 1>, scalar_prefetch = 1 : i64, scratch_operands = 0 : i64, tpu.core_type = #tpu.core_type<tc>, window_params = [{pipeline_mode = #tpu.pipeline_mode<synchronous>, transform_indices = @transform_0, window_bounds = array<i64: 32, 32>}, {pipeline_mode = #tpu.pipeline_mode<synchronous>, transform_indices = @transform_1, window_bounds = array<i64: 96, 32>}, {pipeline_mode = #tpu.pipeline_mode<synchronous>, transform_indices = @transform_2, window_bounds = array<i64: 96, 32>}, {pipeline_mode = #tpu.pipeline_mode<synchronous>, transform_indices = @transform_3, window_bounds = array<i64: 8, 32>}, {pipeline_mode = #tpu.pipeline_mode<synchronous>, transform_indices = @transform_4, window_bounds = array<i64: 32, 1>}]} {
    %c0 = arith.constant 0 : index
    %c0_0 = arith.constant 0 : index
    %0 = vector.load %arg5[%c0, %c0_0] : memref<8x32xf32, #tpu.memory_space<vmem>>, vector<8x32xf32>
    %1 = tpu.iota {dimensions = array<i32: 0>} : vector<32x1xi32>
    %c16_i32 = arith.constant 16 : i32
    %c0_i32 = arith.constant 0 : i32
    %2 = arith.cmpi eq, %c16_i32, %c0_i32 : i32
    %c1_i32 = arith.constant 1 : i32
    %3 = arith.select %2, %c1_i32, %c16_i32 : i32
    %4 = vector.broadcast %3 : i32 to vector<32x1xi32>
    %5 = arith.remsi %1, %4 : vector<32x1xi32>
    %c0_i32_1 = arith.constant 0 : i32
    %6 = vector.broadcast %c0_i32_1 : i32 to vector<32x1xi32>
    %7 = arith.cmpi ne, %5, %6 : vector<32x1xi32>
    %c0_i32_2 = arith.constant 0 : i32
    %8 = vector.broadcast %c0_i32_2 : i32 to vector<32x1xi32>
    %9 = arith.cmpi slt, %5, %8 : vector<32x1xi32>
    %c0_i32_3 = arith.constant 0 : i32
    %10 = arith.cmpi slt, %3, %c0_i32_3 : i32
    %11 = vector.broadcast %10 : i1 to vector<32x1xi1>
    %12 = vector.broadcast %11 : vector<32x1xi1> to vector<32x1xi1>
    %13 = arith.xori %9, %12 : vector<32x1xi1>
    %14 = arith.andi %13, %7 : vector<32x1xi1>
    %15 = vector.broadcast %3 : i32 to vector<32x1xi32>
    %16 = arith.addi %5, %15 : vector<32x1xi32>
    %17 = arith.select %14, %16, %5 : vector<32x1xi1>, vector<32x1xi32>
    %c0_i32_4 = arith.constant 0 : i32
    %18 = vector.broadcast %c0_i32_4 : i32 to vector<32x1xi32>
    %19 = arith.cmpi ne, %17, %18 : vector<32x1xi32>
    %c15_i32 = arith.constant 15 : i32
    %20 = vector.broadcast %c15_i32 : i32 to vector<32x1xi32>
    %21 = arith.cmpi ne, %17, %20 : vector<32x1xi32>
    %c0_5 = arith.constant 0 : index
    %22 = memref.load %arg1[%c0_5] : memref<2xi32, #tpu.memory_space<smem>>
    %23 = vector.broadcast %22 : i32 to vector<32x1xi32>
    %c16_i32_6 = arith.constant 16 : i32
    %24 = vector.broadcast %c16_i32_6 : i32 to vector<32x1xi32>
    %25 = arith.cmpi sge, %1, %24 : vector<32x1xi32>
    %c1 = arith.constant 1 : index
    %26 = memref.load %arg1[%c1] : memref<2xi32, #tpu.memory_space<smem>>
    %27 = vector.broadcast %26 : i32 to vector<32x1xi32>
    %28 = arith.select %25, %27, %23 : vector<32x1xi1>, vector<32x1xi32>
    %29 = arith.cmpi slt, %17, %28 : vector<32x1xi32>
    %30 = arith.extui %29 : vector<32x1xi1> to vector<32x1xi32>
    %31 = arith.sitofp %30 : vector<32x1xi32> to vector<32x1xf32>
    %c0_7 = arith.constant 0 : index
    %c0_8 = arith.constant 0 : index
    %32 = vector.load %arg2[%c0_7, %c0_8] : memref<32x32xf32, #tpu.memory_space<vmem>>, vector<32x32xf32>
    %33 = vector.broadcast %31 : vector<32x1xf32> to vector<32x32xf32>
    %34 = arith.mulf %32, %33 : vector<32x32xf32>
    %c0_9 = arith.constant 0 : index
    %c0_10 = arith.constant 0 : index
    %35 = vector.load %arg3[%c0_9, %c0_10] : memref<96x32xf32, #tpu.memory_space<vmem>>, vector<96x32xf32>
    %36 = vector.extract_strided_slice %0 {offsets = [0, 0], sizes = [1, 32], strides = [1, 1]} : vector<8x32xf32> to vector<1x32xf32>
    %37 = vector.extract_strided_slice %0 {offsets = [1, 0], sizes = [1, 32], strides = [1, 1]} : vector<8x32xf32> to vector<1x32xf32>
    %38 = vector.extract_strided_slice %0 {offsets = [2, 0], sizes = [1, 32], strides = [1, 1]} : vector<8x32xf32> to vector<1x32xf32>
    %c1_i32_11 = arith.constant 1 : i32
    %39 = tpu.dynamic_rotate %34 by %c1_i32_11 dim 0 : vector<32x32xf32>, i32 -> vector<32x32xf32>
    %cst = arith.constant 0.000000e+00 : f32
    %40 = vector.shape_cast %19 : vector<32x1xi1> to vector<32x1xi1>
    %41 = vector.broadcast %40 : vector<32x1xi1> to vector<32x32xi1>
    %42 = vector.broadcast %cst : f32 to vector<32x32xf32>
    %43 = arith.select %41, %39, %42 : vector<32x32xi1>, vector<32x32xf32>
    %c31_i32 = arith.constant 31 : i32
    %44 = tpu.dynamic_rotate %34 by %c31_i32 dim 0 : vector<32x32xf32>, i32 -> vector<32x32xf32>
    %cst_12 = arith.constant 0.000000e+00 : f32
    %45 = vector.shape_cast %21 : vector<32x1xi1> to vector<32x1xi1>
    %46 = vector.broadcast %45 : vector<32x1xi1> to vector<32x32xi1>
    %47 = vector.broadcast %cst_12 : f32 to vector<32x32xf32>
    %48 = arith.select %46, %44, %47 : vector<32x32xi1>, vector<32x32xf32>
    %49 = tpu.concatenate %43, %34, %48 in 1 : vector<32x32xf32>, vector<32x32xf32>, vector<32x32xf32> -> vector<32x96xf32>
    %cst_13 = arith.constant dense<0.000000e+00> : vector<32x32xf32>
    %50 = tpu.matmul %49, %35, %cst_13 {dimension_numbers = #tpu.dot_dimension_numbers<[1], [0], [0], [1], [0, 0, 1, 1], [], []>} : vector<32x96xf32>, vector<96x32xf32>, vector<32x32xf32> -> vector<32x32xf32>
    %51 = vector.broadcast %36 : vector<1x32xf32> to vector<32x32xf32>
    %52 = arith.addf %50, %51 : vector<32x32xf32>
    %cst_14 = arith.constant dense<0.000000e+00> : vector<32xf32>
    %53 = vector.multi_reduction <add>, %52, %cst_14 [1] : vector<32x32xf32> to vector<32xf32>
    %54 = vector.shape_cast %53 : vector<32xf32> to vector<32x1xf32>
    %55 = arith.mulf %52, %52 : vector<32x32xf32>
    %cst_15 = arith.constant dense<0.000000e+00> : vector<32xf32>
    %56 = vector.multi_reduction <add>, %55, %cst_15 [1] : vector<32x32xf32> to vector<32xf32>
    %57 = vector.shape_cast %56 : vector<32xf32> to vector<32x1xf32>
    %cst_16 = arith.constant 3.125000e-02 : f32
    %58 = vector.broadcast %cst_16 : f32 to vector<32x1xf32>
    %59 = arith.mulf %54, %58 : vector<32x1xf32>
    %cst_17 = arith.constant 3.125000e-02 : f32
    %60 = vector.broadcast %cst_17 : f32 to vector<32x1xf32>
    %61 = arith.mulf %57, %60 : vector<32x1xf32>
    %62 = arith.mulf %59, %59 : vector<32x1xf32>
    %63 = arith.subf %61, %62 : vector<32x1xf32>
    %64 = vector.broadcast %59 : vector<32x1xf32> to vector<32x32xf32>
    %65 = arith.subf %52, %64 : vector<32x32xf32>
    %cst_18 = arith.constant 9.99999974E-6 : f32
    %66 = vector.broadcast %cst_18 : f32 to vector<32x1xf32>
    %67 = arith.addf %63, %66 : vector<32x1xf32>
    %68 = math.rsqrt %67 : vector<32x1xf32>
    %69 = vector.broadcast %68 : vector<32x1xf32> to vector<32x32xf32>
    %70 = arith.mulf %65, %69 : vector<32x32xf32>
    %71 = vector.broadcast %37 : vector<1x32xf32> to vector<32x32xf32>
    %72 = arith.mulf %70, %71 : vector<32x32xf32>
    %73 = vector.broadcast %38 : vector<1x32xf32> to vector<32x32xf32>
    %74 = arith.addf %72, %73 : vector<32x32xf32>
    %cst_19 = arith.constant 0.000000e+00 : f32
    %75 = vector.broadcast %cst_19 : f32 to vector<32x32xf32>
    %76 = arith.maximumf %74, %75 : vector<32x32xf32>
    %c0_20 = arith.constant 0 : index
    %c0_21 = arith.constant 0 : index
    %77 = vector.load %arg4[%c0_20, %c0_21] : memref<96x32xf32, #tpu.memory_space<vmem>>, vector<96x32xf32>
    %78 = vector.extract_strided_slice %0 {offsets = [3, 0], sizes = [1, 32], strides = [1, 1]} : vector<8x32xf32> to vector<1x32xf32>
    %79 = vector.extract_strided_slice %0 {offsets = [4, 0], sizes = [1, 32], strides = [1, 1]} : vector<8x32xf32> to vector<1x32xf32>
    %80 = vector.extract_strided_slice %0 {offsets = [5, 0], sizes = [1, 32], strides = [1, 1]} : vector<8x32xf32> to vector<1x32xf32>
    %c1_i32_22 = arith.constant 1 : i32
    %81 = tpu.dynamic_rotate %76 by %c1_i32_22 dim 0 : vector<32x32xf32>, i32 -> vector<32x32xf32>
    %cst_23 = arith.constant 0.000000e+00 : f32
    %82 = vector.shape_cast %19 : vector<32x1xi1> to vector<32x1xi1>
    %83 = vector.broadcast %82 : vector<32x1xi1> to vector<32x32xi1>
    %84 = vector.broadcast %cst_23 : f32 to vector<32x32xf32>
    %85 = arith.select %83, %81, %84 : vector<32x32xi1>, vector<32x32xf32>
    %c31_i32_24 = arith.constant 31 : i32
    %86 = tpu.dynamic_rotate %76 by %c31_i32_24 dim 0 : vector<32x32xf32>, i32 -> vector<32x32xf32>
    %cst_25 = arith.constant 0.000000e+00 : f32
    %87 = vector.shape_cast %21 : vector<32x1xi1> to vector<32x1xi1>
    %88 = vector.broadcast %87 : vector<32x1xi1> to vector<32x32xi1>
    %89 = vector.broadcast %cst_25 : f32 to vector<32x32xf32>
    %90 = arith.select %88, %86, %89 : vector<32x32xi1>, vector<32x32xf32>
    %91 = tpu.concatenate %85, %76, %90 in 1 : vector<32x32xf32>, vector<32x32xf32>, vector<32x32xf32> -> vector<32x96xf32>
    %cst_26 = arith.constant dense<0.000000e+00> : vector<32x32xf32>
    %92 = tpu.matmul %91, %77, %cst_26 {dimension_numbers = #tpu.dot_dimension_numbers<[1], [0], [0], [1], [0, 0, 1, 1], [], []>} : vector<32x96xf32>, vector<96x32xf32>, vector<32x32xf32> -> vector<32x32xf32>
    %93 = vector.broadcast %78 : vector<1x32xf32> to vector<32x32xf32>
    %94 = arith.addf %92, %93 : vector<32x32xf32>
    %cst_27 = arith.constant dense<0.000000e+00> : vector<32xf32>
    %95 = vector.multi_reduction <add>, %94, %cst_27 [1] : vector<32x32xf32> to vector<32xf32>
    %96 = vector.shape_cast %95 : vector<32xf32> to vector<32x1xf32>
    %97 = arith.mulf %94, %94 : vector<32x32xf32>
    %cst_28 = arith.constant dense<0.000000e+00> : vector<32xf32>
    %98 = vector.multi_reduction <add>, %97, %cst_28 [1] : vector<32x32xf32> to vector<32xf32>
    %99 = vector.shape_cast %98 : vector<32xf32> to vector<32x1xf32>
    %cst_29 = arith.constant 3.125000e-02 : f32
    %100 = vector.broadcast %cst_29 : f32 to vector<32x1xf32>
    %101 = arith.mulf %96, %100 : vector<32x1xf32>
    %cst_30 = arith.constant 3.125000e-02 : f32
    %102 = vector.broadcast %cst_30 : f32 to vector<32x1xf32>
    %103 = arith.mulf %99, %102 : vector<32x1xf32>
    %104 = arith.mulf %101, %101 : vector<32x1xf32>
    %105 = arith.subf %103, %104 : vector<32x1xf32>
    %106 = vector.broadcast %101 : vector<32x1xf32> to vector<32x32xf32>
    %107 = arith.subf %94, %106 : vector<32x32xf32>
    %cst_31 = arith.constant 9.99999974E-6 : f32
    %108 = vector.broadcast %cst_31 : f32 to vector<32x1xf32>
    %109 = arith.addf %105, %108 : vector<32x1xf32>
    %110 = math.rsqrt %109 : vector<32x1xf32>
    %111 = vector.broadcast %110 : vector<32x1xf32> to vector<32x32xf32>
    %112 = arith.mulf %107, %111 : vector<32x32xf32>
    %113 = vector.broadcast %79 : vector<1x32xf32> to vector<32x32xf32>
    %114 = arith.mulf %112, %113 : vector<32x32xf32>
    %115 = vector.broadcast %80 : vector<1x32xf32> to vector<32x32xf32>
    %116 = arith.addf %114, %115 : vector<32x32xf32>
    %cst_32 = arith.constant 0.000000e+00 : f32
    %117 = vector.broadcast %cst_32 : f32 to vector<32x32xf32>
    %118 = arith.maximumf %116, %117 : vector<32x32xf32>
    %119 = vector.extract_strided_slice %0 {offsets = [6, 0], sizes = [1, 32], strides = [1, 1]} : vector<8x32xf32> to vector<1x32xf32>
    %120 = vector.extract_strided_slice %0 {offsets = [7, 0], sizes = [1, 1], strides = [1, 1]} : vector<8x32xf32> to vector<1x1xf32>
    %121 = vector.broadcast %119 : vector<1x32xf32> to vector<32x32xf32>
    %122 = arith.mulf %118, %121 : vector<32x32xf32>
    %cst_33 = arith.constant dense<0.000000e+00> : vector<32xf32>
    %123 = vector.multi_reduction <add>, %122, %cst_33 [1] : vector<32x32xf32> to vector<32xf32>
    %124 = vector.shape_cast %123 : vector<32xf32> to vector<32x1xf32>
    %125 = vector.broadcast %120 : vector<1x1xf32> to vector<32x1xf32>
    %126 = arith.addf %124, %125 : vector<32x1xf32>
    %127 = arith.mulf %126, %31 : vector<32x1xf32>
    %cst_34 = arith.constant 0.000000e+00 : f32
    %128 = vector.broadcast %cst_34 : f32 to vector<32x1xf32>
    %129 = arith.maximumf %127, %128 : vector<32x1xf32>
    %c0_35 = arith.constant 0 : index
    %c0_36 = arith.constant 0 : index
    %130 = vector.load %arg6[%c0_35, %c0_36] : memref<32x1xf32, #tpu.memory_space<vmem>>, vector<32x1xf32>
    tpu.vector_store %arg6[%c0_35, %c0_36], %129 {strides = array<i32>} : memref<32x1xf32, #tpu.memory_space<vmem>>, vector<32x1xf32>,
    return
  }
  func.func @transform_0(%arg0: i32, %arg1: memref<2xi32, #tpu.memory_space<smem>>) -> (i32, i32) {
    %c0_i32 = arith.constant 0 : i32
    %c0_i32_0 = arith.constant 0 : i32
    %c0_i32_1 = arith.constant 0 : i32
    return %c0_i32, %c0_i32_0 : i32, i32
  }
  func.func @transform_1(%arg0: i32, %arg1: memref<2xi32, #tpu.memory_space<smem>>) -> (i32, i32) {
    %c0_i32 = arith.constant 0 : i32
    %c0_i32_0 = arith.constant 0 : i32
    %c0_i32_1 = arith.constant 0 : i32
    return %c0_i32, %c0_i32_0 : i32, i32
  }
  func.func @transform_2(%arg0: i32, %arg1: memref<2xi32, #tpu.memory_space<smem>>) -> (i32, i32) {
    %c0_i32 = arith.constant 0 : i32
    %c0_i32_0 = arith.constant 0 : i32
    %c0_i32_1 = arith.constant 0 : i32
    return %c0_i32, %c0_i32_0 : i32, i32
  }
  func.func @transform_3(%arg0: i32, %arg1: memref<2xi32, #tpu.memory_space<smem>>) -> (i32, i32) {
    %c0_i32 = arith.constant 0 : i32
    %c0_i32_0 = arith.constant 0 : i32
    %c0_i32_1 = arith.constant 0 : i32
    return %c0_i32, %c0_i32_0 : i32, i32
  }
  func.func @transform_4(%arg0: i32, %arg1: memref<2xi32, #tpu.memory_space<smem>>) -> (i32, i32) {
    %c0_i32 = arith.constant 0 : i32
    %c0_i32_0 = arith.constant 0 : i32
    %c0_i32_1 = arith.constant 0 : i32
    return %c0_i32, %c0_i32_0 : i32, i32
  }
}

</mosaic_0001>

<llo_original>
// kernel: tpu_custom_call.1
$region0: #{tpu_custom_call.1}
  #allocation0 [shape = 'u32[]', space=smem, size = 0x4, offset = 0x4, fixed_abs, tag = 'smem constant byte address 0x4 - core index']
  #allocation1 [shape = 'u32[144,128]{1,0:T(1,128)}', space=vmem, size = 0x12000, scoped, tag = 'internal scratch']
  #allocation2 [shape = 's32[1]{0}', space=sflag, size = 0x4, scoped, tag = 'scoped memory for tpu_custom_call.1']
  #allocation3 [shape = 'u8[512]{0}', space=smem, size = 0x200, scoped, tag = 'prefetched SMEM operand 0']
  %s0 = inlined_call_operand.vmem [shape: s32[2], index: 0, kind: input, shape index: {}]
  %s1 = inlined_call_operand.vmem [shape: f32[32,32], index: 1, kind: input, shape index: {}]
  %s2 = inlined_call_operand.vmem [shape: f32[96,32], index: 2, kind: input, shape index: {}]
  %s3 = inlined_call_operand.vmem [shape: f32[96,32], index: 3, kind: input, shape index: {}]
  %s4 = inlined_call_operand.vmem [shape: f32[8,32], index: 4, kind: input, shape index: {}]
  %s5 = inlined_call_operand.vmem [shape: f32[32,1], index: 5, kind: output, shape index: {}]
  %s6 = sld [smem:[#allocation0]]
  $region26: #{tpu_custom_call.1} parent=0
    _
  %s8 = ssub.s32 1, %s6
  %s9 = scalar_select 0, %s8, %s6
  %s10 = sshll.u32 %s0, 4
  %s11 = int_to_ptr.vmem [resolvable:$true] %s10
  %13 = dma.vmem_to_smem %s11, 16, [#allocation3], [#allocation2]
  %14 = dma.done [#allocation2], 16
  %15 = sfence
  // Predicated region
  $region2: #{tpu_custom_call.1} parent=0 // pred_check
    _
  $region3: #{tpu_custom_call.1} parent=0 // pred_check_branch
    %17 = sbr.rel (0) target = $region5
  $region4: #{tpu_custom_call.1} parent=0 // pred_region
    _
  $region5: #{tpu_custom_call.1} parent=0 // pred_fallthru
    _
  // Predicated region
  $region6: #{tpu_custom_call.1} parent=0 // pred_check
    _
  $region7: #{tpu_custom_call.1} parent=0 // pred_check_branch
    %19 = sbr.rel (0) target = $region9
  $region8: #{tpu_custom_call.1} parent=0 // pred_region
    _
  $region9: #{tpu_custom_call.1} parent=0 // pred_fallthru
    _
  // Predicated region
  $region10: #{tpu_custom_call.1} parent=0 // pred_check
    _
  $region11: #{tpu_custom_call.1} parent=0 // pred_check_branch
    %21 = sbr.rel (0) target = $region13
  $region12: #{tpu_custom_call.1} parent=0 // pred_region
    _
  $region13: #{tpu_custom_call.1} parent=0 // pred_fallthru
    _
  // Predicated region
  $region14: #{tpu_custom_call.1} parent=0 // pred_check
    _
  $region15: #{tpu_custom_call.1} parent=0 // pred_check_branch
    %23 = sbr.rel (0) target = $region17
  $region16: #{tpu_custom_call.1} parent=0 // pred_region
    _
  $region17: #{tpu_custom_call.1} parent=0 // pred_fallthru
    _
  %v24 = vld [vmem:[%s4] sm:$0xff]
  %v25 = vlaneseq
  %v26 = vshrl.u32 %v25, 7
  %v27 = vadd.s32 %v26, 8
  %v28 = vadd.s32 %v26, 16
  %v29 = vadd.s32 %v26, 24
  %vm30 = vcmp.lt.s32.totalorder %v26, 0
  %v31 = vsub.s32 0, %v26
  %v32 = vsel %vm30, %v31, %v26
  %v33 = vshrl.u32 %v32, 4
  %v34 = vand.u32 %v32, 15
  %v35 = vsub.s32 0, %v34
  %v36 = vsel %vm30, %v35, %v34
  %vm37 = vcmp.lt.s32.totalorder %v27, 0
  %v38 = vsub.s32 0, %v27
  %v39 = vsel %vm37, %v38, %v27
  %v40 = vshrl.u32 %v39, 4
  %v41 = vand.u32 %v39, 15
  %v42 = vsub.s32 0, %v41
  %v43 = vsel %vm37, %v42, %v41
  %vm44 = vcmp.lt.s32.totalorder %v28, 0
  %v45 = vsub.s32 0, %v28
  %v46 = vsel %vm44, %v45, %v28
  %v47 = vshrl.u32 %v46, 4
  %v48 = vand.u32 %v46, 15
  %v49 = vsub.s32 0, %v48
  %v50 = vsel %vm44, %v49, %v48
  %vm51 = vcmp.lt.s32.totalorder %v29, 0
  %v52 = vsub.s32 0, %v29
  %v53 = vsel %vm51, %v52, %v29
  %v54 = vshrl.u32 %v53, 4
  %v55 = vand.u32 %v53, 15
  %v56 = vsub.s32 0, %v55
  %v57 = vsel %vm51, %v56, %v55
  %vm58 = vcmp.ne.s32.totalorder %v36, 0
  %vm59 = vcmp.ne.s32.totalorder %v43, 0
  %vm60 = vcmp.ne.s32.totalorder %v50, 0
  %vm61 = vcmp.ne.s32.totalorder %v57, 0
  %vm62 = vcmp.lt.s32.totalorder %v36, 0
  %vm63 = vcmp.lt.s32.totalorder %v43, 0
  %vm64 = vcmp.lt.s32.totalorder %v50, 0
  %vm65 = vcmp.lt.s32.totalorder %v57, 0
  %vm66 = vmand %vm62, %vm58
  %vm67 = vmand %vm63, %vm59
  %vm68 = vmand %vm64, %vm60
  %vm69 = vmand %vm65, %vm61
  %v70 = vadd.s32 %v36, 16
  %v71 = vadd.s32 %v43, 16
  %v72 = vadd.s32 %v50, 16
  %v73 = vadd.s32 %v57, 16
  %v74 = vsel %vm66, %v70, %v36
  %v75 = vsel %vm67, %v71, %v43
  %v76 = vsel %vm68, %v72, %v50
  %v77 = vsel %vm69, %v73, %v57
  %vm78 = vcmp.ne.s32.totalorder %v74, 0
  %vm79 = vcmp.ne.s32.totalorder %v75, 0
  %vm80 = vcmp.ne.s32.totalorder %v76, 0
  %vm81 = vcmp.ne.s32.totalorder %v77, 0
  %vm82 = vcmp.ne.s32.totalorder %v74, 15
  %vm83 = vcmp.ne.s32.totalorder %v75, 15
  %vm84 = vcmp.ne.s32.totalorder %v76, 15
  %vm85 = vcmp.ne.s32.totalorder %v77, 15
  %s86 = sld [smem:[#allocation3]]
  %v87 = vstv %s86
  %vm88 = vcmp.ge.s32.totalorder %v26, 16
  %vm89 = vcmp.ge.s32.totalorder %v27, 16
  %vm90 = vcmp.ge.s32.totalorder %v28, 16
  %vm91 = vcmp.ge.s32.totalorder %v29, 16
  %s92 = sld [smem:[#allocation3 + $0x1]]
  %v93 = vstv %s92
  %v94 = vsel %vm88, %v93, %v87
  %v95 = vsel %vm89, %v93, %v87
  %v96 = vsel %vm90, %v93, %v87
  %v97 = vsel %vm91, %v93, %v87
  %vm98 = vcmp.lt.s32.totalorder %v74, %v94
  %vm99 = vcmp.lt.s32.totalorder %v75, %v95
  %vm100 = vcmp.lt.s32.totalorder %v76, %v96
  %vm101 = vcmp.lt.s32.totalorder %v77, %v97
  %v102 = vsel %vm98, 1, 0
  %v103 = vsel %vm99, 1, 0
  %v104 = vsel %vm100, 1, 0
  %v105 = vsel %vm101, 1, 0
  %v106 = vcvt.s32.f32 %v102
  %v107 = vcvt.s32.f32 %v103
  %v108 = vcvt.s32.f32 %v104
  %v109 = vcvt.s32.f32 %v105
  %v110 = vld [vmem:[%s1] sm:$0xff]
  %v111 = vld [vmem:[%s1 + $0x8] sm:$0xff]
  %v112 = vld [vmem:[%s1 + $0x10] sm:$0xff]
  %v113 = vld [vmem:[%s1 + $0x18] sm:$0xff]
  %v114 = vmul.f32 %v110, %v106
  %v115 = vmul.f32 %v111, %v107
  %v116 = vmul.f32 %v112, %v108
  %v117 = vmul.f32 %v113, %v109
  %v118 = vld [vmem:[%s2] sm:$0xff]
  %v119 = vld [vmem:[%s2 + $0x8] sm:$0xff]
  %v120 = vld [vmem:[%s2 + $0x10] sm:$0xff]
  %v121 = vld [vmem:[%s2 + $0x18] sm:$0xff]
  %v122 = vld [vmem:[%s2 + $0x20] sm:$0xff]
  %v123 = vld [vmem:[%s2 + $0x28] sm:$0xff]
  %v124 = vld [vmem:[%s2 + $0x30] sm:$0xff]
  %v125 = vld [vmem:[%s2 + $0x38] sm:$0xff]
  %v126 = vld [vmem:[%s2 + $0x40] sm:$0xff]
  %v127 = vld [vmem:[%s2 + $0x48] sm:$0xff]
  %v128 = vld [vmem:[%s2 + $0x50] sm:$0xff]
  %v129 = vld [vmem:[%s2 + $0x58] sm:$0xff]
  %v130 = vrot.slane %v114, 7
  %v131 = vrot.slane %v115, 7
  %v132 = vrot.slane %v116, 7
  %v133 = vrot.slane %v117, 7
  %vm134 = vcmp.lt.s32.totalorder %v26, 1
  %v135 = vsel %vm134, %v132, %v133
  %v136 = vsel %vm134, %v131, %v132
  %v137 = vsel %vm134, %v130, %v131
  %v138 = vsel %vm134, %v133, %v130
  %v139 = vsel %vm78, 1, 0
  %v140 = vsel %vm79, 1, 0
  %v141 = vsel %vm80, 1, 0
  %v142 = vsel %vm81, 1, 0
  %vm143 = vcmp.eq.s32.totalorder %v139, 1
  %vm144 = vcmp.eq.s32.totalorder %v140, 1
  %vm145 = vcmp.eq.s32.totalorder %v141, 1
  %vm146 = vcmp.eq.s32.totalorder %v142, 1
  %v147 = vsel %vm143, %v138, 0.0
  %v148 = vsel %vm144, %v137, 0.0
  %v149 = vsel %vm145, %v136, 0.0
  %v150 = vsel %vm146, %v135, 0.0
  %v151 = vrot.slane %v114, 1
  %v152 = vrot.slane %v115, 1
  %v153 = vrot.slane %v116, 1
  %v154 = vrot.slane %v117, 1
  %vm155 = vcmp.lt.s32.totalorder %v26, 7
  %v156 = vsel %vm155, %v153, %v154
  %v157 = vsel %vm155, %v152, %v153
  %v158 = vsel %vm155, %v151, %v152
  %v159 = vsel %vm155, %v154, %v151
  %v160 = vsel %vm82, 1, 0
  %v161 = vsel %vm83, 1, 0
  %v162 = vsel %vm84, 1, 0
  %v163 = vsel %vm85, 1, 0
  %vm164 = vcmp.eq.s32.totalorder %v160, 1
  %vm165 = vcmp.eq.s32.totalorder %v161, 1
  %vm166 = vcmp.eq.s32.totalorder %v162, 1
  %vm167 = vcmp.eq.s32.totalorder %v163, 1
  %v168 = vsel %vm164, %v158, 0.0
  %v169 = vsel %vm165, %v157, 0.0
  %v170 = vsel %vm166, %v156, 0.0
  %v171 = vsel %vm167, %v159, 0.0
  %176 = vrot.lane.b32.xlu0 %v114, 32
  %v177 = vpop.permute.xlu0 %176
  %178 = vrot.lane.b32.xlu0 %v115, 32
  %v179 = vpop.permute.xlu0 %178
  %180 = vrot.lane.b32.xlu0 %v116, 32
  %v181 = vpop.permute.xlu0 %180
  %182 = vrot.lane.b32.xlu0 %v117, 32
  %v183 = vpop.permute.xlu0 %182
  %192 = vrot.lane.b32.xlu0 %v168, 64
  %v193 = vpop.permute.xlu0 %192
  %194 = vrot.lane.b32.xlu0 %v169, 64
  %v195 = vpop.permute.xlu0 %194
  %196 = vrot.lane.b32.xlu0 %v170, 64
  %v197 = vpop.permute.xlu0 %196
  %198 = vrot.lane.b32.xlu0 %v171, 64
  %v199 = vpop.permute.xlu0 %198
  %vm204 = vcmask 261120
  %v205 = vsel %vm204, %v147, %v177
  %v206 = vsel %vm204, %v148, %v179
  %v207 = vsel %vm204, %v149, %v181
  %v208 = vsel %vm204, %v150, %v183
  %vm209 = vcmask 523264
  %v210 = vsel %vm209, %v205, %v193
  %v211 = vsel %vm209, %v206, %v195
  %v212 = vsel %vm209, %v207, %v197
  %v213 = vsel %vm209, %v208, %v199
  %v214 = vlaneseq
  %v215 = vshrl.u32 %v214, 7
  %v216 = vsub.s32 0, %v215
  %v217 = vrot.slane %v24, %v216
  %vm218 = vcmask 785408
  %v220 = vsel %vm218, %v210, 0
  %v223 = vsel %vm218, %v211, 0
  %v226 = vsel %vm218, %v212, 0
  %v229 = vsel %vm218, %v213, 0
  %231 = vmatprep.subr.mxu0 0.0
  %232 = vmatpush1.msra.mxu0 %v118
  %233 = vmatprep.subr.mxu0 0.0
  %234 = vmatpush1.msra.mxu0 %v119
  %235 = vmatprep.subr.mxu0 0.0
  %236 = vmatpush1.msra.mxu0 %v120
  %237 = vmatprep.subr.mxu0 0.0
  %238 = vmatpush1.msra.mxu0 %v121
  %239 = vmatprep.subr.mxu0 0.0
  %240 = vmatpush1.msra.mxu0 %v122
  %241 = vmatprep.subr.mxu0 0.0
  %242 = vmatpush1.msra.mxu0 %v123
  %243 = vmatprep.subr.mxu0 0.0
  %244 = vmatpush1.msra.mxu0 %v124
  %245 = vmatprep.subr.mxu0 0.0
  %246 = vmatpush1.msra.mxu0 %v125
  %247 = vmatprep.subr.mxu0 0.0
  %248 = vmatpush1.msra.mxu0 %v126
  %249 = vmatprep.subr.mxu0 0.0
  %250 = vmatpush1.msra.mxu0 %v127
  %251 = vmatprep.subr.mxu0 0.0
  %252 = vmatpush1.msra.mxu0 %v128
  %253 = vmatprep.subr.mxu0 0.0
  %254 = vmatpush1.msra.mxu0 %v129
  %255 = vmatprep.subr.mxu0 0.0
  %256 = vmatpush1.msra.mxu0 0.0
  %257 = vmatprep.subr.mxu0 0.0
  %258 = vmatpush1.msra.mxu0 0.0
  %259 = vmatprep.subr.mxu0 0.0
  %260 = vmatpush1.msra.mxu0 0.0
  %261 = vmatprep.subr.mxu0 0.0
  %262 = vmatpush1.msra.mxu0 0.0
  %263 = vmatprep.subr.mxu0 0.0
  %264 = vmatpush1.msra.mxu0 0.0
  %265 = vmatprep.subr.mxu0 0.0
  %266 = vmatpush1.msra.mxu0 0.0
  %267 = vmatprep.subr.mxu0 0.0
  %268 = vmatpush1.msra.mxu0 0.0
  %269 = vmatprep.subr.mxu0 0.0
  %270 = vmatpush1.msra.mxu0 0.0
  %271 = vmatprep.subr.mxu0 0.0
  %272 = vmatpush1.msra.mxu0 0.0
  %273 = vmatprep.subr.mxu0 0.0
  %274 = vmatpush1.msra.mxu0 0.0
  %275 = vmatprep.subr.mxu0 0.0
  %276 = vmatpush1.msra.mxu0 0.0
  %277 = vmatprep.subr.mxu0 0.0
  %278 = vmatpush1.msra.mxu0 0.0
  %279 = vmatprep.subr.mxu0 0.0
  %280 = vmatpush1.msra.mxu0 0.0
  %281 = vmatprep.subr.mxu0 0.0
  %282 = vmatpush1.msra.mxu0 0.0
  %283 = vmatprep.subr.mxu0 0.0
  %284 = vmatpush1.msra.mxu0 0.0
  %285 = vmatprep.subr.mxu0 0.0
  %286 = vmatpush1.msra.mxu0 0.0
  %287 = vmatprep.subr.mxu0 0.0
  %288 = vmatpush1.msra.mxu0 0.0
  %289 = vmatprep.subr.mxu0 0.0
  %290 = vmatpush1.msra.mxu0 0.0
  %291 = vmatprep.subr.mxu0 0.0
  %292 = vmatpush1.msra.mxu0 0.0
  %293 = vmatprep.subr.mxu0 0.0
  %294 = vmatpush1.msra.mxu0 0.0
  %295 = vmatprep.mubr.f32.mxu0 0.0
  %296 = vmatmul.mubr.f32.gmra.mrb[0].mxu0 %v220
  %v297 = vpop.f32.mrb[0].mxu0
  %v298 = vadd.f32 %v217, %v297
  %v299 = vpop.f32.mrb[0].mxu0
  %300 = vmatprep.mubr.f32.mxu0 0.0
  %301 = vmatmul.mubr.f32.gmra.mrb[0].mxu0 %v223
  %v302 = vpop.f32.mrb[0].mxu0
  %v303 = vadd.f32 %v217, %v302
  %v304 = vpop.f32.mrb[0].mxu0
  %305 = vmatprep.mubr.f32.mxu0 0.0
  %306 = vmatmul.mubr.f32.gmra.mrb[0].mxu0 %v226
  %v307 = vpop.f32.mrb[0].mxu0
  %v308 = vadd.f32 %v217, %v307
  %v309 = vpop.f32.mrb[0].mxu0
  %310 = vmatprep.mubr.f32.mxu0 0.0
  %311 = vmatmul.mubr.f32.gmra.mrb[0].mxu0 %v229
  %v312 = vpop.f32.mrb[0].mxu0
  %v313 = vadd.f32 %v217, %v312
  %v314 = vpop.f32.mrb[0].mxu0
  %315 = vdwg.mxu0
  %v316 = vsel %vm204, %v298, 0.0
  %317 = vadd.xlane.f32.xlu0 %v316
  %v318 = vpop.xlane.xlu0 %317
  %v319 = vsel %vm204, %v303, 0.0
  %320 = vadd.xlane.f32.xlu0 %v319
  %v321 = vpop.xlane.xlu0 %320
  %v322 = vsel %vm204, %v308, 0.0
  %323 = vadd.xlane.f32.xlu0 %v322
  %v324 = vpop.xlane.xlu0 %323
  %v325 = vsel %vm204, %v313, 0.0
  %326 = vadd.xlane.f32.xlu0 %v325
  %v327 = vpop.xlane.xlu0 %326
  %v328 = vmul.f32 %v298, %v298
  %v329 = vmul.f32 %v303, %v303
  %v330 = vmul.f32 %v308, %v308
  %v331 = vmul.f32 %v313, %v313
  %v332 = vsel %vm204, %v328, 0.0
  %333 = vadd.xlane.f32.xlu0 %v332
  %v334 = vpop.xlane.xlu0 %333
  %v335 = vsel %vm204, %v329, 0.0
  %336 = vadd.xlane.f32.xlu0 %v335
  %v337 = vpop.xlane.xlu0 %336
  %v338 = vsel %vm204, %v330, 0.0
  %339 = vadd.xlane.f32.xlu0 %v338
  %v340 = vpop.xlane.xlu0 %339
  %v341 = vsel %vm204, %v331, 0.0
  %342 = vadd.xlane.f32.xlu0 %v341
  %v343 = vpop.xlane.xlu0 %342
  %v344 = vmul.f32 %v318, 0.03125
  %v345 = vmul.f32 %v321, 0.03125
  %v346 = vmul.f32 %v324, 0.03125
  %v347 = vmul.f32 %v327, 0.03125
  %v348 = vmul.f32 %v334, 0.03125
  %v349 = vmul.f32 %v337, 0.03125
  %v350 = vmul.f32 %v340, 0.03125
  %v351 = vmul.f32 %v343, 0.03125
  %v352 = vmul.f32 %v344, %v344
  %v353 = vmul.f32 %v345, %v345
  %v354 = vmul.f32 %v346, %v346
  %v355 = vmul.f32 %v347, %v347
  %v356 = vsub.f32 %v348, %v352
  %v357 = vsub.f32 %v349, %v353
  %v358 = vsub.f32 %v350, %v354
  %v359 = vsub.f32 %v351, %v355
  %v360 = vsub.f32 %v298, %v344
  %v361 = vsub.f32 %v303, %v345
  %v362 = vsub.f32 %v308, %v346
  %v363 = vsub.f32 %v313, %v347
  %v364 = vadd.f32 %v356, 1e-05
  %v365 = vadd.f32 %v357, 1e-05
  %v366 = vadd.f32 %v358, 1e-05
  %v367 = vadd.f32 %v359, 1e-05
  %v368 = vrsqrt.pop %v364
  %v369 = vrsqrt.pop %v365
  %v370 = vrsqrt.pop %v366
  %v371 = vrsqrt.pop %v367
  %v372 = vmul.f32 %v360, %v368
  %v373 = vmul.f32 %v361, %v369
  %v374 = vmul.f32 %v362, %v370
  %v375 = vmul.f32 %v363, %v371
  %v376 = vlaneseq
  %v377 = vshrl.u32 %v376, 7
  %v378 = vsub.s32 1, %v377
  %v379 = vrot.slane %v24, %v378
  %v380 = vmul.f32 %v372, %v379
  %v381 = vmul.f32 %v373, %v379
  %v382 = vmul.f32 %v374, %v379
  %v383 = vmul.f32 %v375, %v379
  %v384 = vlaneseq
  %v385 = vshrl.u32 %v384, 7
  %v386 = vsub.s32 2, %v385
  %v387 = vrot.slane %v24, %v386
  %v388 = vadd.f32 %v380, %v387
  %v389 = vadd.f32 %v381, %v387
  %v390 = vadd.f32 %v382, %v387
  %v391 = vadd.f32 %v383, %v387
  %v392 = vmax.f32 %v388, 0.0
  %v393 = vmax.f32 %v389, 0.0
  %v394 = vmax.f32 %v390, 0.0
  %v395 = vmax.f32 %v391, 0.0
  %v396 = vld [vmem:[%s3] sm:$0xff]
  %v397 = vld [vmem:[%s3 + $0x8] sm:$0xff]
  %v398 = vld [vmem:[%s3 + $0x10] sm:$0xff]
  %v399 = vld [vmem:[%s3 + $0x18] sm:$0xff]
  %v400 = vld [vmem:[%s3 + $0x20] sm:$0xff]
  %v401 = vld [vmem:[%s3 + $0x28] sm:$0xff]
  %v402 = vld [vmem:[%s3 + $0x30] sm:$0xff]
  %v403 = vld [vmem:[%s3 + $0x38] sm:$0xff]
  %v404 = vld [vmem:[%s3 + $0x40] sm:$0xff]
  %v405 = vld [vmem:[%s3 + $0x48] sm:$0xff]
  %v406 = vld [vmem:[%s3 + $0x50] sm:$0xff]
  %v407 = vld [vmem:[%s3 + $0x58] sm:$0xff]
  %v408 = vrot.slane %v392, 7
  %v409 = vrot.slane %v393, 7
  %v410 = vrot.slane %v394, 7
  %v411 = vrot.slane %v395, 7
  %v412 = vsel %vm134, %v410, %v411
  %v413 = vsel %vm134, %v409, %v410
  %v414 = vsel %vm134, %v408, %v409
  %v415 = vsel %vm134, %v411, %v408
  %v416 = vsel %vm143, %v415, 0.0
  %v417 = vsel %vm144, %v414, 0.0
  %v418 = vsel %vm145, %v413, 0.0
  %v419 = vsel %vm146, %v412, 0.0
  %v420 = vrot.slane %v392, 1
  %v421 = vrot.slane %v393, 1
  %v422 = vrot.slane %v394, 1
  %v423 = vrot.slane %v395, 1
  %v424 = vsel %vm155, %v422, %v423
  %v425 = vsel %vm155, %v421, %v422
  %v426 = vsel %vm155, %v420, %v421
  %v427 = vsel %vm155, %v423, %v420
  %v428 = vsel %vm164, %v426, 0.0
  %v429 = vsel %vm165, %v425, 0.0
  %v430 = vsel %vm166, %v424, 0.0
  %v431 = vsel %vm167, %v427, 0.0
  %436 = vrot.lane.b32.xlu0 %v392, 32
  %v437 = vpop.permute.xlu0 %436
  %438 = vrot.lane.b32.xlu0 %v393, 32
  %v439 = vpop.permute.xlu0 %438
  %440 = vrot.lane.b32.xlu0 %v394, 32
  %v441 = vpop.permute.xlu0 %440
  %442 = vrot.lane.b32.xlu0 %v395, 32
  %v443 = vpop.permute.xlu0 %442
  %452 = vrot.lane.b32.xlu0 %v428, 64
  %v453 = vpop.permute.xlu0 %452
  %454 = vrot.lane.b32.xlu0 %v429, 64
  %v455 = vpop.permute.xlu0 %454
  %456 = vrot.lane.b32.xlu0 %v430, 64
  %v457 = vpop.permute.xlu0 %456
  %458 = vrot.lane.b32.xlu0 %v431, 64
  %v459 = vpop.permute.xlu0 %458
  %v464 = vsel %vm204, %v416, %v437
  %v465 = vsel %vm204, %v417, %v439
  %v466 = vsel %vm204, %v418, %v441
  %v467 = vsel %vm204, %v419, %v443
  %v468 = vsel %vm209, %v464, %v453
  %v469 = vsel %vm209, %v465, %v455
  %v470 = vsel %vm209, %v466, %v457
  %v471 = vsel %vm209, %v467, %v459
  %v472 = vlaneseq
  %v473 = vshrl.u32 %v472, 7
  %v474 = vsub.s32 3, %v473
  %v475 = vrot.slane %v24, %v474
  %v477 = vsel %vm218, %v468, 0
  %v480 = vsel %vm218, %v469, 0
  %v483 = vsel %vm218, %v470, 0
  %v486 = vsel %vm218, %v471, 0
  %488 = vmatprep.subr.mxu0 0.0
  %489 = vmatpush1.msra.mxu0 %v396
  %490 = vmatprep.subr.mxu0 0.0
  %491 = vmatpush1.msra.mxu0 %v397
  %492 = vmatprep.subr.mxu0 0.0
  %493 = vmatpush1.msra.mxu0 %v398
  %494 = vmatprep.subr.mxu0 0.0
  %495 = vmatpush1.msra.mxu0 %v399
  %496 = vmatprep.subr.mxu0 0.0
  %497 = vmatpush1.msra.mxu0 %v400
  %498 = vmatprep.subr.mxu0 0.0
  %499 = vmatpush1.msra.mxu0 %v401
  %500 = vmatprep.subr.mxu0 0.0
  %501 = vmatpush1.msra.mxu0 %v402
  %502 = vmatprep.subr.mxu0 0.0
  %503 = vmatpush1.msra.mxu0 %v403
  %504 = vmatprep.subr.mxu0 0.0
  %505 = vmatpush1.msra.mxu0 %v404
  %506 = vmatprep.subr.mxu0 0.0
  %507 = vmatpush1.msra.mxu0 %v405
  %508 = vmatprep.subr.mxu0 0.0
  %509 = vmatpush1.msra.mxu0 %v406
  %510 = vmatprep.subr.mxu0 0.0
  %511 = vmatpush1.msra.mxu0 %v407
  %512 = vmatprep.subr.mxu0 0.0
  %513 = vmatpush1.msra.mxu0 0.0
  %514 = vmatprep.subr.mxu0 0.0
  %515 = vmatpush1.msra.mxu0 0.0
  %516 = vmatprep.subr.mxu0 0.0
  %517 = vmatpush1.msra.mxu0 0.0
  %518 = vmatprep.subr.mxu0 0.0
  %519 = vmatpush1.msra.mxu0 0.0
  %520 = vmatprep.subr.mxu0 0.0
  %521 = vmatpush1.msra.mxu0 0.0
  %522 = vmatprep.subr.mxu0 0.0
  %523 = vmatpush1.msra.mxu0 0.0
  %524 = vmatprep.subr.mxu0 0.0
  %525 = vmatpush1.msra.mxu0 0.0
  %526 = vmatprep.subr.mxu0 0.0
  %527 = vmatpush1.msra.mxu0 0.0
  %528 = vmatprep.subr.mxu0 0.0
  %529 = vmatpush1.msra.mxu0 0.0
  %530 = vmatprep.subr.mxu0 0.0
  %531 = vmatpush1.msra.mxu0 0.0
  %532 = vmatprep.subr.mxu0 0.0
  %533 = vmatpush1.msra.mxu0 0.0
  %534 = vmatprep.subr.mxu0 0.0
  %535 = vmatpush1.msra.mxu0 0.0
  %536 = vmatprep.subr.mxu0 0.0
  %537 = vmatpush1.msra.mxu0 0.0
  %538 = vmatprep.subr.mxu0 0.0
  %539 = vmatpush1.msra.mxu0 0.0
  %540 = vmatprep.subr.mxu0 0.0
  %541 = vmatpush1.msra.mxu0 0.0
  %542 = vmatprep.subr.mxu0 0.0
  %543 = vmatpush1.msra.mxu0 0.0
  %544 = vmatprep.subr.mxu0 0.0
  %545 = vmatpush1.msra.mxu0 0.0
  %546 = vmatprep.subr.mxu0 0.0
  %547 = vmatpush1.msra.mxu0 0.0
  %548 = vmatprep.subr.mxu0 0.0
  %549 = vmatpush1.msra.mxu0 0.0
  %550 = vmatprep.subr.mxu0 0.0
  %551 = vmatpush1.msra.mxu0 0.0
  %552 = vmatprep.mubr.f32.mxu0 0.0
  %553 = vmatmul.mubr.f32.gmra.mrb[0].mxu0 %v477
  %v554 = vpop.f32.mrb[0].mxu0
  %v555 = vadd.f32 %v475, %v554
  %v556 = vpop.f32.mrb[0].mxu0
  %557 = vmatprep.mubr.f32.mxu0 0.0
  %558 = vmatmul.mubr.f32.gmra.mrb[0].mxu0 %v480
  %v559 = vpop.f32.mrb[0].mxu0
  %v560 = vadd.f32 %v475, %v559
  %v561 = vpop.f32.mrb[0].mxu0
  %562 = vmatprep.mubr.f32.mxu0 0.0
  %563 = vmatmul.mubr.f32.gmra.mrb[0].mxu0 %v483
  %v564 = vpop.f32.mrb[0].mxu0
  %v565 = vadd.f32 %v475, %v564
  %v566 = vpop.f32.mrb[0].mxu0
  %567 = vmatprep.mubr.f32.mxu0 0.0
  %568 = vmatmul.mubr.f32.gmra.mrb[0].mxu0 %v486
  %v569 = vpop.f32.mrb[0].mxu0
  %v570 = vadd.f32 %v475, %v569
  %v571 = vpop.f32.mrb[0].mxu0
  %572 = vdwg.mxu0
  %v573 = vsel %vm204, %v555, 0.0
  %574 = vadd.xlane.f32.xlu0 %v573
  %v575 = vpop.xlane.xlu0 %574
  %v576 = vsel %vm204, %v560, 0.0
  %577 = vadd.xlane.f32.xlu0 %v576
  %v578 = vpop.xlane.xlu0 %577
  %v579 = vsel %vm204, %v565, 0.0
  %580 = vadd.xlane.f32.xlu0 %v579
  %v581 = vpop.xlane.xlu0 %580
  %v582 = vsel %vm204, %v570, 0.0
  %583 = vadd.xlane.f32.xlu0 %v582
  %v584 = vpop.xlane.xlu0 %583
  %v585 = vmul.f32 %v555, %v555
  %v586 = vmul.f32 %v560, %v560
  %v587 = vmul.f32 %v565, %v565
  %v588 = vmul.f32 %v570, %v570
  %v589 = vsel %vm204, %v585, 0.0
  %590 = vadd.xlane.f32.xlu0 %v589
  %v591 = vpop.xlane.xlu0 %590
  %v592 = vsel %vm204, %v586, 0.0
  %593 = vadd.xlane.f32.xlu0 %v592
  %v594 = vpop.xlane.xlu0 %593
  %v595 = vsel %vm204, %v587, 0.0
  %596 = vadd.xlane.f32.xlu0 %v595
  %v597 = vpop.xlane.xlu0 %596
  %v598 = vsel %vm204, %v588, 0.0
  %599 = vadd.xlane.f32.xlu0 %v598
  %v600 = vpop.xlane.xlu0 %599
  %v601 = vmul.f32 %v575, 0.03125
  %v602 = vmul.f32 %v578, 0.03125
  %v603 = vmul.f32 %v581, 0.03125
  %v604 = vmul.f32 %v584, 0.03125
  %v605 = vmul.f32 %v591, 0.03125
  %v606 = vmul.f32 %v594, 0.03125
  %v607 = vmul.f32 %v597, 0.03125
  %v608 = vmul.f32 %v600, 0.03125
  %v609 = vmul.f32 %v601, %v601
  %v610 = vmul.f32 %v602, %v602
  %v611 = vmul.f32 %v603, %v603
  %v612 = vmul.f32 %v604, %v604
  %v613 = vsub.f32 %v605, %v609
  %v614 = vsub.f32 %v606, %v610
  %v615 = vsub.f32 %v607, %v611
  %v616 = vsub.f32 %v608, %v612
  %v617 = vsub.f32 %v555, %v601
  %v618 = vsub.f32 %v560, %v602
  %v619 = vsub.f32 %v565, %v603
  %v620 = vsub.f32 %v570, %v604
  %v621 = vadd.f32 %v613, 1e-05
  %v622 = vadd.f32 %v614, 1e-05
  %v623 = vadd.f32 %v615, 1e-05
  %v624 = vadd.f32 %v616, 1e-05
  %v625 = vrsqrt.pop %v621
  %v626 = vrsqrt.pop %v622
  %v627 = vrsqrt.pop %v623
  %v628 = vrsqrt.pop %v624
  %v629 = vmul.f32 %v617, %v625
  %v630 = vmul.f32 %v618, %v626
  %v631 = vmul.f32 %v619, %v627
  %v632 = vmul.f32 %v620, %v628
  %v633 = vlaneseq
  %v634 = vshrl.u32 %v633, 7
  %v635 = vsub.s32 4, %v634
  %v636 = vrot.slane %v24, %v635
  %v637 = vmul.f32 %v629, %v636
  %v638 = vmul.f32 %v630, %v636
  %v639 = vmul.f32 %v631, %v636
  %v640 = vmul.f32 %v632, %v636
  %v641 = vlaneseq
  %v642 = vshrl.u32 %v641, 7
  %v643 = vsub.s32 5, %v642
  %v644 = vrot.slane %v24, %v643
  %v645 = vadd.f32 %v637, %v644
  %v646 = vadd.f32 %v638, %v644
  %v647 = vadd.f32 %v639, %v644
  %v648 = vadd.f32 %v640, %v644
  %v649 = vmax.f32 %v645, 0.0
  %v650 = vmax.f32 %v646, 0.0
  %v651 = vmax.f32 %v647, 0.0
  %v652 = vmax.f32 %v648, 0.0
  %v653 = vlaneseq
  %v654 = vshrl.u32 %v653, 7
  %v655 = vsub.s32 6, %v654
  %v656 = vrot.slane %v24, %v655
  %v657 = vmul.f32 %v649, %v656
  %v658 = vmul.f32 %v650, %v656
  %v659 = vmul.f32 %v651, %v656
  %v660 = vmul.f32 %v652, %v656
  %v661 = vsel %vm204, %v657, 0.0
  %662 = vadd.xlane.f32.xlu0 %v661
  %v663 = vpop.xlane.xlu0 %662
  %v664 = vsel %vm204, %v658, 0.0
  %665 = vadd.xlane.f32.xlu0 %v664
  %v666 = vpop.xlane.xlu0 %665
  %v667 = vsel %vm204, %v659, 0.0
  %668 = vadd.xlane.f32.xlu0 %v667
  %v669 = vpop.xlane.xlu0 %668
  %v670 = vsel %vm204, %v660, 0.0
  %671 = vadd.xlane.f32.xlu0 %v670
  %v672 = vpop.xlane.xlu0 %671
  %v673 = vlaneseq
  %v674 = vshrl.u32 %v673, 7
  %v675 = vsub.s32 7, %v674
  %v676 = vrot.slane %v24, %v675
  %v677 = vadd.f32 %v663, %v676
  %v678 = vadd.f32 %v666, %v676
  %v679 = vadd.f32 %v669, %v676
  %v680 = vadd.f32 %v672, %v676
  %v681 = vmul.f32 %v677, %v106
  %v682 = vmul.f32 %v678, %v107
  %v683 = vmul.f32 %v679, %v108
  %v684 = vmul.f32 %v680, %v109
  %v685 = vmax.f32 %v681, 0.0
  %v686 = vmax.f32 %v682, 0.0
  %v687 = vmax.f32 %v683, 0.0
  %v688 = vmax.f32 %v684, 0.0
  %vm689 = vcmask 7168
  %690 = vst.msk [vmem:[%s5] sm:$0xff] %vm689, %v685
  %691 = vst.msk [vmem:[%s5 + $0x8] sm:$0xff] %vm689, %v686
  %692 = vst.msk [vmem:[%s5 + $0x10] sm:$0xff] %vm689, %v687
  %693 = vst.msk [vmem:[%s5 + $0x18] sm:$0xff] %vm689, %v688
  // Predicated region
  $region18: #{tpu_custom_call.1} parent=0 // pred_check
    _
  $region19: #{tpu_custom_call.1} parent=0 // pred_check_branch
    %695 = sbr.rel (0) target = $region21
  $region20: #{tpu_custom_call.1} parent=0 // pred_region
    _
  $region21: #{tpu_custom_call.1} parent=0 // pred_fallthru
    _
  // Predicated region
  $region22: #{tpu_custom_call.1} parent=0 // pred_check
    _
  $region23: #{tpu_custom_call.1} parent=0 // pred_check_branch
    %697 = sbr.rel (0) target = $region25
  $region24: #{tpu_custom_call.1} parent=0 // pred_region
    _
  $region25: #{tpu_custom_call.1} parent=0 // pred_fallthru
    _

</llo_original>
